<compile_context>
chip_gen: v7x
topology: tpu7x:2x2x1
jax: 0.10.0
libtpu: 0.0.40
codegen_flags: <defaults>
</compile_context>

<pallas_src>
import functools

import jax
import jax.numpy as jnp
from jax.experimental import pallas as pl
from jax.experimental.pallas import tpu as pltpu

_LANES = 128


def _round_up(v, m):
    return (v + m - 1) // m * m


def _poisson_kernel(coef_ref, x_ref, bias_ref, out_ref, acc_ref, *,
                    rows, tr, kblocks, finalize_in_kernel, needs_mask):
    i = pl.program_id(0)          # parallel split (megacore axis)
    k = pl.program_id(1)          # reduction step (pipelined over row blocks)

    @pl.when(k == 0)
    def _init():
        acc_ref[...] = jnp.zeros_like(acc_ref)

    # Fully packed (tr, 128) tile: upcast (no-op for f32 inputs) + VPU multiply.
    prod = coef_ref[...].astype(jnp.float32) * x_ref[...].astype(jnp.float32)

    if needs_mask:
        # Zero rows past the true row count: covers the garbage pad of the
        # partial boundary block and clamped duplicate blocks when num_blocks
        # does not divide evenly across splits.
        logical_block = i * kblocks + k
        row_start = logical_block * tr
        row_ids = row_start + jax.lax.broadcasted_iota(jnp.int32, (tr, _LANES), 0)
        prod = jnp.where(row_ids < rows, prod, 0.0)

    # vreg-wise accumulation: collapse the tile onto one (8,128) vreg with pure
    # VPU adds (no cross-sublane/XLU work in the steady state).  The reshape is
    # tile-aligned ((8,128) groups) so it is layout-free.
    if tr > 8:
        partial = jnp.sum(prod.reshape(tr // 8, 8, _LANES), axis=0)
    else:
        partial = prod
    acc_ref[...] += partial

    @pl.when(k == pl.num_programs(1) - 1)
    def _finalize():
        lane_sums = jnp.sum(acc_ref[...], axis=0, keepdims=True)      # (1,128)
        if finalize_in_kernel:
            dot = jnp.sum(lane_sums, axis=1, keepdims=True)           # (1,1)
            out_ref[...] = jnp.exp(bias_ref[0] + dot)                 # bias: SMEM scalar
        else:
            out_ref[...] = lane_sums     # lane-dense partial; combined in wrapper


def poisson_forward(coefficients, bias, x, *, tile_rows=2048, num_splits=None):
    """exp(bias + dot(coefficients, x)), returned with shape (1,) like the torch module."""
    assert coefficients.ndim == 1 and coefficients.shape == x.shape
    assert bias.shape == (1,)
    n = coefficients.shape[0]
    itemsize = max(jnp.dtype(coefficients.dtype).itemsize,
                   jnp.dtype(x.dtype).itemsize)

    # --- Lane-dense (rows, 128) slab.  Pad (an HBM copy) only when n is not
    #     already a multiple of 128; never pad out to tile multiples.
    rem = n % _LANES

    def as_slab(v):
        if rem:
            v = jnp.pad(v, (0, _LANES - rem))     # <128 zeros, exact for a dot
        return v.reshape(-1, _LANES)

    coef2 = as_slab(coefficients)
    x2 = as_slab(x)
    rows = coef2.shape[0]
    if rows < 8:
        # Tiny input: round up to one (8,128) vreg group (a few KiB, negligible).
        coef2 = jnp.pad(coef2, ((0, 8 - rows), (0, 0)))
        x2 = jnp.pad(x2, ((0, 8 - rows), (0, 0)))
        rows = 8

    # --- Tiling / grid.  tr is a multiple of 8 and never exceeds the row count,
    #     so only the boundary block is partial (masked in-kernel).
    tr = max(8, min(_round_up(tile_rows, 8), (rows // 8) * 8))
    num_blocks = pl.cdiv(rows, tr)
    if num_splits is None:
        num_splits = 2 if num_blocks >= 2 else 1   # use both v7x TensorCores
    nsplits = max(1, min(num_splits, num_blocks))
    kblocks = pl.cdiv(num_blocks, nsplits)
    needs_mask = (rows % tr != 0) or (nsplits * kblocks != num_blocks)
    finalize_in_kernel = (nsplits == 1)

    if nsplits * kblocks == num_blocks:
        in_idx = lambda i, k: (i * kblocks + k, 0)
    else:
        last = num_blocks - 1
        # Clamp duplicate trailing blocks; they are fully masked in the kernel.
        in_idx = lambda i, k: (jnp.minimum(i * kblocks + k, last), 0)

    if finalize_in_kernel:
        out_shape = jax.ShapeDtypeStruct((1, 1), jnp.float32)
        out_spec = pl.BlockSpec((1, 1), lambda i, k: (0, 0))
        out_elems = 1
    else:
        out_shape = jax.ShapeDtypeStruct((nsplits, _LANES), jnp.float32)
        out_spec = pl.BlockSpec((1, _LANES), lambda i, k: (i, 0))
        out_elems = nsplits * _LANES

    bias_f32 = bias.astype(jnp.float32).reshape(1)

    # scoped-VMEM headroom (2 inputs x double buffering) when big tiles requested
    buf_bytes = 2 * 2 * tr * _LANES * itemsize
    cparams = dict(dimension_semantics=("parallel", "arbitrary"))
    if buf_bytes > 12 * 1024 * 1024:
        cparams["vmem_limit_bytes"] = buf_bytes + 8 * 1024 * 1024

    kernel = functools.partial(
        _poisson_kernel, rows=rows, tr=tr, kblocks=kblocks,
        finalize_in_kernel=finalize_in_kernel, needs_mask=needs_mask)

    cost = pl.CostEstimate(
        flops=2 * n + 2,
        transcendentals=1,
        bytes_accessed=2 * n * itemsize + 4 + out_elems * 4,
    )

    out = pl.pallas_call(
        kernel,
        out_shape=out_shape,
        grid_spec=pltpu.PrefetchScalarGridSpec(
            num_scalar_prefetch=0,
            grid=(nsplits, kblocks),
            in_specs=[
                pl.BlockSpec((tr, _LANES), in_idx),                    # coefficients
                pl.BlockSpec((tr, _LANES), in_idx),                    # input
                pl.BlockSpec(memory_space=pltpu.MemorySpace.SMEM),     # bias scalar
            ],
            out_specs=out_spec,
            scratch_shapes=[pltpu.VMEM((8, _LANES), jnp.float32)],     # vreg accumulator
        ),
        compiler_params=pltpu.CompilerParams(**cparams),
        cost_estimate=cost,
    )(coef2, x2, bias_f32)

    if finalize_in_kernel:
        return out.reshape(1)
    # Tiny epilogue: combine the per-split lane partials (<= 2x128 floats).
    return jnp.exp(bias_f32 + jnp.sum(out)).reshape(1)


if __name__ == "__main__":
    key = jax.random.PRNGKey(0)
    k_coef, k_bias, k_x = jax.random.split(key, 3)

    # --- Case 1: the module's shipped size (1024 = 8 rows x 128 lanes):
    #     pad-free reshape, single grid step, full forward in-kernel.
    size = 1024
    coefficients = jax.random.normal(k_coef, (size,), dtype=jnp.float32) * 0.01
    bias = jax.random.normal(k_bias, (1,), dtype=jnp.float32) * 0.1
    x = jax.random.normal(k_x, (size,), dtype=jnp.float32)
    out = poisson_forward(coefficients, bias, x)
    jax.block_until_ready(out)
    ref = jnp.exp(bias + jnp.dot(coefficients, x))
    assert out.shape == (1,)
    assert jnp.allclose(out, ref, rtol=1e-5, atol=1e-5), (out, ref)

    # --- Case 2: ragged size exercising the pipelined reduction grid, the
    #     2-way parallel split, the clamped index_map and the in-kernel mask.
    size2 = 2500
    c2 = jax.random.normal(k_coef, (size2,), dtype=jnp.float32) * 0.01
    x2 = jax.random.normal(k_x, (size2,), dtype=jnp.float32)
    out2 = poisson_forward(c2, bias, x2, tile_rows=8)
    jax.block_until_ready(out2)
    ref2 = jnp.exp(bias + jnp.dot(c2, x2))
    assert out2.shape == (1,)
    assert jnp.allclose(out2, ref2, rtol=1e-5, atol=1e-5), (out2, ref2)

    # --- Case 3: bf16 streaming (half the HBM bytes), f32 in-kernel accumulation.
    c3 = c2.astype(jnp.bfloat16)
    x3 = x2.astype(jnp.bfloat16)
    out3 = poisson_forward(c3, bias, x3, tile_rows=8)
    jax.block_until_ready(out3)
    ref3 = jnp.exp(bias + jnp.dot(c3.astype(jnp.float32), x3.astype(jnp.float32)))
    assert jnp.allclose(out3, ref3, rtol=1e-4, atol=1e-4), (out3, ref3)

    print("KERNEL_OK")
</pallas_src>

<mosaic_0001>
module attributes {stable_mosaic.version = 11 : i64} {
  func.func @_poisson_kernel(%arg0: i32, %arg1: i32, %arg2: memref<8x128xf32, #tpu.memory_space<vmem>>, %arg3: memref<8x128xf32, #tpu.memory_space<vmem>>, %arg4: memref<1xf32, #tpu.memory_space<smem>>, %arg5: memref<1x1xf32, #tpu.memory_space<vmem>>, %arg6: memref<8x128xf32, #tpu.memory_space<vmem>>) attributes {dimension_semantics = [#tpu.dimension_semantics<parallel>, #tpu.dimension_semantics<arbitrary>], iteration_bounds = array<i64: 1, 1>, scalar_prefetch = 0 : i64, scratch_operands = 1 : i64, tpu.core_type = #tpu.core_type<tc>, window_params = [{transform_indices = @transform_0, window_bounds = array<i64: 8, 128>}, {transform_indices = @transform_1, window_bounds = array<i64: 8, 128>}, {transform_indices = @transform_2, window_bounds = array<i64: 1>}, {pipeline_mode = #tpu.pipeline_mode<synchronous>, transform_indices = @transform_3, window_bounds = array<i64: 1, 1>}]} {
    %c0_i32 = arith.constant 0 : i32
    %0 = arith.cmpi eq, %arg1, %c0_i32 : i32
    %1 = arith.extui %0 : i1 to i32
    %c0_i32_0 = arith.constant 0 : i32
    %2 = arith.cmpi ne, %1, %c0_i32_0 : i32
    scf.if %2 {
      %cst = arith.constant 0.000000e+00 : f32
      %12 = vector.broadcast %cst : f32 to vector<8x128xf32>
      %c0_10 = arith.constant 0 : index
      %c0_11 = arith.constant 0 : index
      %13 = vector.load %arg6[%c0_10, %c0_11] : memref<8x128xf32, #tpu.memory_space<vmem>>, vector<8x128xf32>
      tpu.vector_store %arg6[%c0_10, %c0_11], %12 {strides = array<i32>} : memref<8x128xf32, #tpu.memory_space<vmem>>, vector<8x128xf32>,
    } else {
    }
    %c0 = arith.constant 0 : index
    %c0_1 = arith.constant 0 : index
    %3 = vector.load %arg2[%c0, %c0_1] : memref<8x128xf32, #tpu.memory_space<vmem>>, vector<8x128xf32>
    %c0_2 = arith.constant 0 : index
    %c0_3 = arith.constant 0 : index
    %4 = vector.load %arg3[%c0_2, %c0_3] : memref<8x128xf32, #tpu.memory_space<vmem>>, vector<8x128xf32>
    %5 = arith.mulf %3, %4 : vector<8x128xf32>
    %c0_4 = arith.constant 0 : index
    %c0_5 = arith.constant 0 : index
    %6 = vector.load %arg6[%c0_4, %c0_5] : memref<8x128xf32, #tpu.memory_space<vmem>>, vector<8x128xf32>
    %7 = arith.addf %6, %5 : vector<8x128xf32>
    %c0_6 = arith.constant 0 : index
    %c0_7 = arith.constant 0 : index
    %8 = vector.load %arg6[%c0_6, %c0_7] : memref<8x128xf32, #tpu.memory_space<vmem>>, vector<8x128xf32>
    tpu.vector_store %arg6[%c0_6, %c0_7], %7 {strides = array<i32>} : memref<8x128xf32, #tpu.memory_space<vmem>>, vector<8x128xf32>,
    %c0_i32_8 = arith.constant 0 : i32
    %9 = arith.cmpi eq, %arg1, %c0_i32_8 : i32
    %10 = arith.extui %9 : i1 to i32
    %c0_i32_9 = arith.constant 0 : i32
    %11 = arith.cmpi ne, %10, %c0_i32_9 : i32
    scf.if %11 {
      %c0_10 = arith.constant 0 : index
      %c0_11 = arith.constant 0 : index
      %12 = vector.load %arg6[%c0_10, %c0_11] : memref<8x128xf32, #tpu.memory_space<vmem>>, vector<8x128xf32>
      %cst = arith.constant dense<0.000000e+00> : vector<128xf32>
      %13 = vector.multi_reduction <add>, %12, %cst [0] : vector<8x128xf32> to vector<128xf32>
      %14 = vector.shape_cast %13 : vector<128xf32> to vector<1x128xf32>
      %cst_12 = arith.constant dense<0.000000e+00> : vector<1xf32>
      %15 = vector.multi_reduction <add>, %14, %cst_12 [1] : vector<1x128xf32> to vector<1xf32>
      %16 = vector.shape_cast %15 : vector<1xf32> to vector<1x1xf32>
      %c0_13 = arith.constant 0 : index
      %17 = memref.load %arg4[%c0_13] : memref<1xf32, #tpu.memory_space<smem>>
      %18 = vector.broadcast %17 : f32 to vector<1x1xf32>
      %19 = arith.addf %18, %16 : vector<1x1xf32>
      %20 = math.exp %19 : vector<1x1xf32>
      %c0_14 = arith.constant 0 : index
      %c0_15 = arith.constant 0 : index
      %21 = vector.load %arg5[%c0_14, %c0_15] : memref<1x1xf32, #tpu.memory_space<vmem>>, vector<1x1xf32>
      tpu.vector_store %arg5[%c0_14, %c0_15], %20 {strides = array<i32>} : memref<1x1xf32, #tpu.memory_space<vmem>>, vector<1x1xf32>,
    } else {
    }
    return
  }
  func.func @transform_0(%arg0: i32, %arg1: i32) -> (i32, i32) {
    %c1_i32 = arith.constant 1 : i32
    %0 = arith.muli %arg0, %c1_i32 : i32
    %1 = arith.addi %0, %arg1 : i32
    %c0_i32 = arith.constant 0 : i32
    %c0_i32_0 = arith.constant 0 : i32
    return %1, %c0_i32 : i32, i32
  }
  func.func @transform_1(%arg0: i32, %arg1: i32) -> (i32, i32) {
    %c1_i32 = arith.constant 1 : i32
    %0 = arith.muli %arg0, %c1_i32 : i32
    %1 = arith.addi %0, %arg1 : i32
    %c0_i32 = arith.constant 0 : i32
    %c0_i32_0 = arith.constant 0 : i32
    return %1, %c0_i32 : i32, i32
  }
  func.func @transform_2(%arg0: i32, %arg1: i32) -> i32 {
    %c0_i32 = arith.constant 0 : i32
    %c0_i32_0 = arith.constant 0 : i32
    return %c0_i32 : i32
  }
  func.func @transform_3(%arg0: i32, %arg1: i32) -> (i32, i32) {
    %c0_i32 = arith.constant 0 : i32
    %c0_i32_0 = arith.constant 0 : i32
    %c0_i32_1 = arith.constant 0 : i32
    return %c0_i32, %c0_i32_0 : i32, i32
  }
}

</mosaic_0001>

<llo_original>
// kernel: tpu_custom_call.1
$region0: #{tpu_custom_call.1}
  #allocation0 [shape = 'u32[]', space=smem, size = 0x4, offset = 0x4, fixed_abs, tag = 'smem constant byte address 0x4 - core index']
  #allocation1 [shape = 'u32[144,128]{1,0:T(1,128)}', space=vmem, size = 0x12000, scoped, tag = 'internal scratch']
  #allocation2 [shape = 'f32[8,128]{1,0:T(8,128)}', space=vmem, size = 0x1000, scoped, tag = 'scratch operand']
  #allocation3 [shape = 'f32[1]{0:T(128)S(6)}', space=smem, size = 0x200, scoped, tag = 'scoped memory for tpu_custom_call.1']
  %s0 = inlined_call_operand.hbm [shape: f32[8,128], index: 0, kind: input, shape index: {}]
  %s1 = inlined_call_operand.hbm [shape: f32[8,128], index: 1, kind: input, shape index: {}]
  %s2 = inlined_call_operand.<no memory space> [shape: f32[1], index: 2, kind: input, shape index: {}]
  %s3 = inlined_call_operand.hbm [shape: f32[1,1], index: 3, kind: output, shape index: {}]
  %s4 = sld [smem:[#allocation0]]
  $region38: #{tpu_custom_call.1} parent=0
    _
  %s6 = ssub.s32 1, %s4
  %s7 = scalar_select 0, %s6, %s4
  %8 = sst [smem:[#allocation3]] %s2
  $region1: #{tpu_custom_call.1} parent=0
    #allocation4 [shape = 'u8[4096]{0}', space=vmem, size = 0x1000, scoped, tag = 'input window, operand 0, single buffered']
    #allocation5 [shape = 's32[1]{0}', space=sflag, size = 0x4, scoped, tag = 'scoped memory for tpu_custom_call.1']
    #allocation6 [shape = 's32[1]{0}', space=sflag, size = 0x4, scoped, tag = 'scoped memory for tpu_custom_call.1']
    #allocation7 [shape = 'u8[4096]{0}', space=vmem, size = 0x1000, scoped, tag = 'input window, operand 1, single buffered']
    #allocation8 [shape = 's32[1]{0}', space=sflag, size = 0x4, scoped, tag = 'scoped memory for tpu_custom_call.1']
    #allocation9 [shape = 'u8[512]{0}', space=vmem, size = 0x400, scoped, tag = 'output window, operand 0, single buffered']
    %9 = vsyncpa [#allocation5], 0
    %10 = vsyncpa [#allocation8], 0
    %11 = vsyncpa [#allocation6], 0
    // Predicated region
    $region2: #{tpu_custom_call.1} parent=1 // pred_check
      _
    $region3: #{tpu_custom_call.1} parent=1 // pred_check_branch
      %13 = sbr.rel (0) target = $region5
    $region4: #{tpu_custom_call.1} parent=1 // pred_region
      %s14 = sadd.s32 0, 0
      %s16 = ssub.s32 128, 128
      %17 = vsyncadd [#allocation5], %s16
      %s18 = smul.addr %s14, 128
      %s19 = scalar_lea.hbm %s0, %s18
      %s21 = sshll.u32 [#allocation4], 4
      %s22 = int_to_ptr.vmem [resolvable:$true] %s21
      %24 = dma.hbm_to_vmem [thread:$0]  %s19, 128, %s22, [#allocation5]
    $region5: #{tpu_custom_call.1} parent=1 // pred_fallthru
      _
    // Predicated region
    $region6: #{tpu_custom_call.1} parent=1 // pred_check
      _
    $region7: #{tpu_custom_call.1} parent=1 // pred_check_branch
      %26 = sbr.rel (0) target = $region9
    $region8: #{tpu_custom_call.1} parent=1 // pred_region
      %s27 = sadd.s32 0, 0
      %s29 = ssub.s32 128, 128
      %30 = vsyncadd [#allocation8], %s29
      %s31 = smul.addr %s27, 128
      %s32 = scalar_lea.hbm %s1, %s31
      %s34 = sshll.u32 [#allocation7], 4
      %s35 = int_to_ptr.vmem [resolvable:$true] %s34
      %37 = dma.hbm_to_vmem [thread:$0]  %s32, 128, %s35, [#allocation8]
    $region9: #{tpu_custom_call.1} parent=1 // pred_fallthru
      _
    // Predicated region
    $region10: #{tpu_custom_call.1} parent=1 // pred_check
      _
    $region11: #{tpu_custom_call.1} parent=1 // pred_check_branch
      %39 = sbr.rel (0) target = $region13
    $region12: #{tpu_custom_call.1} parent=1 // pred_region
      _
    $region13: #{tpu_custom_call.1} parent=1 // pred_fallthru
      _
    // Predicated region
    $region14: #{tpu_custom_call.1} parent=1 // pred_check
      _
    $region15: #{tpu_custom_call.1} parent=1 // pred_check_branch
      %41 = sbr.rel (0) target = $region17
    $region16: #{tpu_custom_call.1} parent=1 // pred_region
      %42 = dma.done [#allocation5], 128
    $region17: #{tpu_custom_call.1} parent=1 // pred_fallthru
      _
    // Predicated region
    $region18: #{tpu_custom_call.1} parent=1 // pred_check
      _
    $region19: #{tpu_custom_call.1} parent=1 // pred_check_branch
      %44 = sbr.rel (0) target = $region21
    $region20: #{tpu_custom_call.1} parent=1 // pred_region
      %45 = dma.done [#allocation8], 128
    $region21: #{tpu_custom_call.1} parent=1 // pred_fallthru
      _
    %s46 = sadd.s32 0, 0
    %s47 = sadd.s32 0, 0
    %p48 = scmp.eq.s32.totalorder 0, 0
    // Predicated region
    $region22: #{tpu_custom_call.1} parent=1 // pred_check
      %p49 = pneg %p48
    $region23: #{tpu_custom_call.1} parent=1 // pred_check_branch
      %51 = sbr.rel (%p49) target = $region25
    $region24: #{tpu_custom_call.1} parent=1 // pred_region
      %52 = vst [vmem:[#allocation2] sm:$0xff] 0.0
    $region25: #{tpu_custom_call.1} parent=1 // pred_fallthru
      _
    %v53 = vld [vmem:[#allocation4] sm:$0xff]
    %v54 = vld [vmem:[#allocation7] sm:$0xff]
    %v55 = vmul.f32 %v53, %v54
    %v56 = vld [vmem:[#allocation2] sm:$0xff]
    %v57 = vadd.f32 %v56, %v55
    %58 = vst [vmem:[#allocation2] sm:$0xff] %v57
    // Predicated region
    $region26: #{tpu_custom_call.1} parent=1 // pred_check
      %p59 = pneg %p48
    $region27: #{tpu_custom_call.1} parent=1 // pred_check_branch
      %61 = sbr.rel (%p59) target = $region29
    $region28: #{tpu_custom_call.1} parent=1 // pred_region
      %v62 = vld [vmem:[#allocation2] sm:$0xff]
      %v63 = vrot.slane %v62, 4
      %v64 = vadd.f32 %v62, %v63
      %v65 = vrot.slane %v64, 2
      %v66 = vadd.f32 %v64, %v65
      %v67 = vrot.slane %v66, 1
      %v68 = vadd.f32 %v66, %v67
      %69 = vadd.xlane.f32.xlu0 %v68
      %v70 = vpop.xlane.xlu0 %69
      %s71 = sld [smem:[#allocation3]]
      %v72 = vstv %s71
      %v73 = vadd.f32 %v72, %v70
      %v74 = vmul.f32 %v73, 1.442695
      %v75 = vpow.pop %v74
      %vm76 = vcmask 0
      %77 = vst.msk [vmem:[#allocation9] sm:$0x1] %vm76, %v75
    $region29: #{tpu_custom_call.1} parent=1 // pred_fallthru
      _
    // Predicated region
    $region30: #{tpu_custom_call.1} parent=1 // pred_check
      _
    $region31: #{tpu_custom_call.1} parent=1 // pred_check_branch
      %79 = sbr.rel (0) target = $region33
    $region32: #{tpu_custom_call.1} parent=1 // pred_region
      %s81 = ssub.s32 16, 16
      %82 = vsyncadd [#allocation6], %s81
      %s84 = sshll.u32 [#allocation9], 4
      %s85 = int_to_ptr.vmem [resolvable:$true] %s84
      %87 = dma.vmem_to_hbm [thread:$0]  %s85, 16, %s3, [#allocation6]
    $region33: #{tpu_custom_call.1} parent=1 // pred_fallthru
      _
    // Predicated region
    $region34: #{tpu_custom_call.1} parent=1 // pred_check
      _
    $region35: #{tpu_custom_call.1} parent=1 // pred_check_branch
      %89 = sbr.rel (0) target = $region37
    $region36: #{tpu_custom_call.1} parent=1 // pred_region
      %90 = dma.done [#allocation6], 16
    $region37: #{tpu_custom_call.1} parent=1 // pred_fallthru
      _
    %91 = vsyncpa [#allocation5], 1
    %92 = vsyncpa [#allocation8], 1
    %93 = vsyncpa [#allocation6], 1

</llo_original>
